<compile_context>
chip_gen: v6e
topology: v6e:2x2x1
jax: 0.10.0
libtpu: 0.0.40
codegen_flags: <defaults>
</compile_context>

<pallas_src>
import functools

import jax
import jax.numpy as jnp
from jax.experimental import pallas as pl
from jax.experimental.pallas import tpu as pltpu


# ---------------------------------------------------------------------------
# Pallas kernel: mix_background hot path
# ---------------------------------------------------------------------------
def _mix_kernel(kind_ref, sidx_ref, didx_ref, flag_ref,     # scalar prefetch (SMEM)
                alpha_ref, expo_ref,                         # f32 SMEM operands
                vid_ref, bstat_ref, bdyn_ref,                # VMEM blocks
                out_ref):
    b = pl.program_id(0)
    is_dyn = kind_ref[b] == 1
    is_mix = flag_ref[b] == 1

    v_raw = vid_ref[...]                                     # (1,1,t_tile,hw_tile)
    # Static background block is (1,1,1,hw_tile): broadcast over t in-kernel.
    bstat_b = jnp.broadcast_to(bstat_ref[...], v_raw.shape)
    bk_raw = jnp.where(is_dyn, bdyn_ref[...], bstat_b)

    # bf16 inputs keep the transcendental chain in bf16 (halves EUP pushes on
    # v6e/v7x; aug-level tolerance).  f32 inputs stay f32.  v5e has no bf16
    # VPU/EUP but Mosaic converts; v5e is HBM-bound either way.
    cdt = jnp.bfloat16 if vid_ref.dtype == jnp.bfloat16 else jnp.float32

    @pl.when(is_mix)
    def _mix():
        v = jnp.clip(v_raw, 0.0, 1.0).astype(cdt)
        bk = jnp.clip(bk_raw, 0.0, 1.0).astype(cdt)
        a = alpha_ref[b].astype(cdt)     # U(0.25, 0.55)
        e = expo_ref[b].astype(cdt)      # U(0.6, 1.0)
        # x ** 0.75 == sqrt(x * sqrt(x)): two EUP sqrts, no pow.
        v75 = jnp.sqrt(v * jnp.sqrt(v))
        b75 = jnp.sqrt(bk * jnp.sqrt(bk))
        mixed = (1.0 - a) * v75 + a * b75
        mixed = jnp.clip(mixed, 0.0, 1.0)
        # x ** e == exp(e * log(x)); x in [0,1], e in [0.6,1] -> log(0)=-inf -> 0.
        mixed = jnp.exp(e * jnp.log(mixed))
        # TODO(synk): on v7x the f32 path still issues ~6 EUP pushes/vreg; a VPU
        # Newton/polynomial x**0.75 would keep it strictly HBM-bound there.
        out_ref[...] = mixed.astype(out_ref.dtype)

    @pl.when(jnp.logical_not(is_mix))
    def _max():
        # clip is monotone: clip(max(v, b), 0, 1) == max(clip(v), clip(b)).
        out_ref[...] = jnp.clip(jnp.maximum(v_raw, bk_raw), 0.0, 1.0
                                ).astype(out_ref.dtype)


# ---------------------------------------------------------------------------
# Tiling
# ---------------------------------------------------------------------------
_TARGET_BLOCK_BYTES = 2 << 20     # ~2 MiB per array per grid step (review: 2-4 MiB)


def _choose_tiles(T, HW, itemsize):
    """Pick (t_tile, hw_tile) for the (1, 1, t_tile, hw_tile) video/out blocks."""
    sub = {4: 8, 2: 16, 1: 32}.get(itemsize, 8)      # dtype-native sublane multiple

    # Minor (lane) tile over HW: full dim when small enough (always legal),
    # otherwise the largest 128-multiple divisor that fits the byte budget.
    if HW % 128 != 0 or HW * itemsize * sub <= _TARGET_BLOCK_BYTES:
        hw_tile = HW
    else:
        cap = max(128, (_TARGET_BLOCK_BYTES // (sub * itemsize)) // 128 * 128)
        hw_tile = 128
        c = 128
        while c <= min(HW, cap):
            if HW % c == 0:
                hw_tile = c
            c += 128

    # Second-minor (sublane) tile over T: prefer divisors (no ragged blocks).
    if T % sub != 0:
        t_tile = T                                    # full dim: always legal
    else:
        budget = max(sub, (_TARGET_BLOCK_BYTES // (hw_tile * itemsize)) // sub * sub)
        t_tile = sub
        c = sub
        while c <= min(T, budget):
            if T % c == 0:
                t_tile = c
            c += sub
    return t_tile, hw_tile


# ---------------------------------------------------------------------------
# pallas_call wrapper
# ---------------------------------------------------------------------------
@functools.partial(jax.jit, static_argnames=("t_tile", "hw_tile"))
def mix_background_pallas(kind, sidx, didx, flag, alpha, expo,
                          vid4, bstat4, bdyn4, *, t_tile, hw_tile):
    """vid4: (B, C, T, HW); bstat4: (Bs, C, 1, HW); bdyn4: (Bd, C, T, HW).
    kind/sidx/didx/flag: int32 (B,); alpha/expo: f32 (B,)."""
    B, C, T, HW = vid4.shape
    grid = (B, C, pl.cdiv(HW, hw_tile), pl.cdiv(T, t_tile))

    def vid_map(b, c, j, t, kind_r, sidx_r, didx_r, flag_r):
        return (b, c, t, j)

    def stat_map(b, c, j, t, kind_r, sidx_r, didx_r, flag_r):
        # Constant across the innermost t axis -> block DMA is reused over t.
        return (sidx_r[b], c, 0, j)

    def dyn_map(b, c, j, t, kind_r, sidx_r, didx_r, flag_r):
        # Static batches pin this operand to block (0,0,0,0): no per-step
        # refetch of the (unused) dynamic background.
        k = kind_r[b]
        return (didx_r[b], c * k, t * k, j * k)

    vmem_spec = pl.BlockSpec((1, 1, t_tile, hw_tile), vid_map)
    stat_spec = pl.BlockSpec((1, 1, 1, hw_tile), stat_map)
    dyn_spec = pl.BlockSpec((1, 1, t_tile, hw_tile), dyn_map)
    smem_spec = pl.BlockSpec(memory_space=pltpu.MemorySpace.SMEM)

    return pl.pallas_call(
        _mix_kernel,
        out_shape=jax.ShapeDtypeStruct((B, C, T, HW), vid4.dtype),
        grid_spec=pltpu.PrefetchScalarGridSpec(
            num_scalar_prefetch=4,
            grid=grid,
            in_specs=[smem_spec, smem_spec, vmem_spec, stat_spec, dyn_spec],
            out_specs=vmem_spec,
        ),
        compiler_params=pltpu.CompilerParams(
            dimension_semantics=("parallel", "parallel", "parallel", "arbitrary"),
            vmem_limit_bytes=40 * 1024 * 1024,   # explicit: v5e default is 16 MiB
        ),
    )(kind, sidx, didx, flag, alpha, expo, vid4, bstat4, bdyn4)


# ---------------------------------------------------------------------------
# Module port (host-side glue in eager JAX, mirroring PyTorch .item() control)
# ---------------------------------------------------------------------------
class MixupBackgroundPallas:
    def __init__(self, img_size, n_steps=1, prob_scale=0.0, prob_shift=0.0,
                 prob_clone=0.0):
        # TODO(synk): T.RandomResizedCrop(bicubic), Transform_Background and
        # Transform_Foreground are external modules; treated as identity here.
        self.img_size = img_size
        self.use_tr_back = prob_shift > 0
        self.alpha_mixup = (0.25, 0.75)
        self.alpha_back = (0.25, 0.55)
        self.exp = (0.6, 1.0)
        self.prob_back_dynamic = 0.2
        self.prob_back_max = 0.05

    def sample_background(self, key, video):
        B, C, T, H, W = video.shape
        keys = jax.random.split(key, 9)
        mask = jax.random.uniform(keys[0], (B,)) < self.prob_back_dynamic
        B_dynamic = int(mask.sum())              # concrete (eager), like .item()
        B_static = B - B_dynamic
        back_static, back_dynamic = None, None

        if B_static > 0:
            frames = []
            for i in range(2):
                idxs_batch = jax.random.randint(keys[1 + 2 * i], (B_static,), 0, B)
                idxs_frame = jax.random.randint(keys[2 + 2 * i], (B_static,), 0, T)
                frames.append(video[idxs_batch, :, idxs_frame])   # (B_static,C,H,W)
            back_static = jnp.amax(jnp.stack(frames, axis=0), axis=0)

        if B_dynamic > 0:
            idxs_batch = jax.random.randint(keys[5], (B_dynamic,), 0, B)
            time_min, time_max = 2, max(2, int(0.25 * T))
            time = int(jax.random.randint(keys[6], (), time_min, time_max + 1))
            time_start = int(jax.random.randint(keys[7], (), 0, T - time + 1))
            idxs_time = jax.random.randint(keys[8], (T,), -1, 2)
            idxs_time = idxs_time.at[0].set(0)
            idxs_time = jnp.clip(jnp.cumsum(idxs_time), 0, time - 1) + time_start
            back_dynamic = video[idxs_batch][:, :, idxs_time]     # (B_dyn,C,T,H,W)

        return back_static, back_dynamic

    def mix_background(self, key, video, back_static, back_dynamic):
        B, C, T, H, W = video.shape
        HW = H * W
        k_perm, k_max, k_alpha, k_exp = jax.random.split(key, 4)

        B_static = 0 if back_static is None else back_static.shape[0]
        B_dynamic = 0 if back_dynamic is None else back_dynamic.shape[0]

        # Which batch position gets which background (mirrors the reference's
        # randperm over cat([static, dynamic])).
        if B_static == 0:
            kind = jnp.ones((B,), jnp.int32)
            sidx = jnp.zeros((B,), jnp.int32)
            didx = jnp.arange(B, dtype=jnp.int32)
        elif B_dynamic == 0:
            kind = jnp.zeros((B,), jnp.int32)
            sidx = jnp.arange(B, dtype=jnp.int32)
            didx = jnp.zeros((B,), jnp.int32)
        else:
            perm = jax.random.permutation(k_perm, B)
            kind = (perm >= B_static).astype(jnp.int32)
            sidx = jnp.where(perm < B_static, perm, 0).astype(jnp.int32)
            didx = jnp.where(perm >= B_static, perm - B_static, 0).astype(jnp.int32)

        mask_max = jax.random.uniform(k_max, (B,)) < self.prob_back_max
        B_add = B - int(mask_max.sum())
        # Positional split like the reference: video[:B_add] mix, rest maximum.
        flag = (jnp.arange(B) < B_add).astype(jnp.int32)

        alpha = jax.random.uniform(k_alpha, (B,), minval=self.alpha_back[0],
                                   maxval=self.alpha_back[1]).astype(jnp.float32)
        expo = jax.random.uniform(k_exp, (B,), minval=self.exp[0],
                                  maxval=self.exp[1]).astype(jnp.float32)

        # Free reshapes only: no dtype casts, no T-expansion of the static back.
        vid4 = video.reshape(B, C, T, HW)
        bstat4 = (back_static.reshape(B_static, C, 1, HW) if B_static > 0
                  else jnp.zeros((1, C, 1, HW), video.dtype))
        bdyn4 = (back_dynamic.reshape(B_dynamic, C, T, HW) if B_dynamic > 0
                 else jnp.zeros((1, C, T, HW), video.dtype))

        t_tile, hw_tile = _choose_tiles(T, HW, jnp.dtype(video.dtype).itemsize)
        out4 = mix_background_pallas(kind, sidx, didx, flag, alpha, expo,
                                     vid4, bstat4, bdyn4,
                                     t_tile=t_tile, hw_tile=hw_tile)
        aux = (vid4, bstat4, bdyn4, kind, sidx, didx, alpha, expo, flag)
        return out4.reshape(B, C, T, H, W), aux

    def __call__(self, video, step, key):
        k_samp, k_mix = jax.random.split(key, 2)
        back_static, back_dynamic = self.sample_background(k_samp, video)
        # No jnp.repeat over T here: the kernel broadcasts the static background
        # over T via its BlockSpec (saves a full T-expanded HBM round-trip).
        # TODO(synk): RandomResizedCrop(bicubic) on back_static and
        # Transform_Background / Transform_Foreground are identity here.
        return self.mix_background(k_mix, video, back_static, back_dynamic)


# ---------------------------------------------------------------------------
# Pure-JAX reference for the kernel math (correctness check)
# ---------------------------------------------------------------------------
def _mix_reference(vid4, bstat4, bdyn4, kind, sidx, didx, alpha, expo, flag):
    B, C, T, HW = vid4.shape
    back = []
    for b in range(B):
        if int(kind[b]) == 1:
            back.append(bdyn4[int(didx[b])].astype(jnp.float32))
        else:
            back.append(jnp.broadcast_to(
                bstat4[int(sidx[b])].astype(jnp.float32), (C, T, HW)))
    back = jnp.stack(back, axis=0)
    v = jnp.clip(vid4.astype(jnp.float32), 0.0, 1.0)
    bk = jnp.clip(back, 0.0, 1.0)
    a = alpha[:, None, None, None]
    e = expo[:, None, None, None]
    f = (flag == 1)[:, None, None, None]
    mixed = (1.0 - a) * v ** 0.75 + a * bk ** 0.75
    mixed = jnp.clip(mixed, 0.0, 1.0) ** e
    return jnp.where(f, mixed, jnp.maximum(v, bk))


if __name__ == "__main__":
    key = jax.random.PRNGKey(0)
    B, C, T, H, W = 4, 3, 8, 16, 16
    HW = H * W

    # ---- direct kernel check: all four (static/dynamic x mix/max) paths -----
    ks = jax.random.split(key, 5)
    vid4 = jax.random.uniform(ks[0], (B, C, T, HW), jnp.float32, -0.1, 1.1)
    bstat4 = jax.random.uniform(ks[1], (2, C, 1, HW), jnp.float32, -0.1, 1.1)
    bdyn4 = jax.random.uniform(ks[2], (2, C, T, HW), jnp.float32, -0.1, 1.1)
    kind = jnp.array([0, 1, 0, 1], jnp.int32)
    sidx = jnp.array([0, 0, 1, 0], jnp.int32)
    didx = jnp.array([0, 0, 0, 1], jnp.int32)
    flag = jnp.array([1, 1, 0, 0], jnp.int32)
    alpha = jax.random.uniform(ks[3], (B,), jnp.float32, 0.25, 0.55)
    expo = jax.random.uniform(ks[4], (B,), jnp.float32, 0.6, 1.0)

    t_tile, hw_tile = _choose_tiles(T, HW, 4)
    out = mix_background_pallas(kind, sidx, didx, flag, alpha, expo,
                                vid4, bstat4, bdyn4,
                                t_tile=t_tile, hw_tile=hw_tile)
    out = jax.block_until_ready(out)
    ref = _mix_reference(vid4, bstat4, bdyn4, kind, sidx, didx, alpha, expo, flag)
    assert out.shape == ref.shape and out.dtype == jnp.float32
    assert float(jnp.max(jnp.abs(out - ref))) < 1e-4

    # ---- direct kernel check: bf16 native path (bf16 transcendental chain) --
    vid_b, bstat_b, bdyn_b = (x.astype(jnp.bfloat16) for x in (vid4, bstat4, bdyn4))
    t_tile_b, hw_tile_b = _choose_tiles(T, HW, 2)
    out_b = mix_background_pallas(kind, sidx, didx, flag, alpha, expo,
                                  vid_b, bstat_b, bdyn_b,
                                  t_tile=t_tile_b, hw_tile=hw_tile_b)
    out_b = jax.block_until_ready(out_b)
    ref_b = _mix_reference(vid_b, bstat_b, bdyn_b, kind, sidx, didx,
                           alpha, expo, flag)
    assert out_b.dtype == jnp.bfloat16
    assert float(jnp.max(jnp.abs(out_b.astype(jnp.float32) - ref_b))) < 5e-2

    # ---- module end-to-end (host-side RNG glue + Pallas hot path) -----------
    k_data, k_fwd = jax.random.split(jax.random.PRNGKey(0))
    video = jax.random.uniform(k_data, (B, C, T, H, W), dtype=jnp.float32)
    module = MixupBackgroundPallas(img_size=H)
    out_mod, aux = module(video, step=0, key=k_fwd)
    out_mod = jax.block_until_ready(out_mod)
    ref_mod = _mix_reference(*aux).reshape(B, C, T, H, W)
    assert out_mod.shape == video.shape and out_mod.dtype == video.dtype
    assert float(jnp.max(jnp.abs(out_mod - ref_mod))) < 1e-4

    print("KERNEL_OK")
</pallas_src>

<mosaic_0001>
module attributes {stable_mosaic.version = 11 : i64} {
  func.func @_mix_kernel(%arg0: i32, %arg1: i32, %arg2: i32, %arg3: i32, %arg4: memref<4xi32, #tpu.memory_space<smem>>, %arg5: memref<4xi32, #tpu.memory_space<smem>>, %arg6: memref<4xi32, #tpu.memory_space<smem>>, %arg7: memref<4xi32, #tpu.memory_space<smem>>, %arg8: memref<4xf32, #tpu.memory_space<smem>>, %arg9: memref<4xf32, #tpu.memory_space<smem>>, %arg10: memref<1x1x8x256xf32, #tpu.memory_space<vmem>>, %arg11: memref<1x1x1x256xf32, #tpu.memory_space<vmem>>, %arg12: memref<1x1x8x256xf32, #tpu.memory_space<vmem>>, %arg13: memref<1x1x8x256xf32, #tpu.memory_space<vmem>>) attributes {dimension_semantics = [#tpu.dimension_semantics<parallel>, #tpu.dimension_semantics<parallel>, #tpu.dimension_semantics<parallel>, #tpu.dimension_semantics<arbitrary>], iteration_bounds = array<i64: 4, 3, 1, 1>, scalar_prefetch = 4 : i64, scratch_operands = 0 : i64, tpu.core_type = #tpu.core_type<tc>, window_params = [{transform_indices = @transform_0, window_bounds = array<i64: 4>}, {transform_indices = @transform_1, window_bounds = array<i64: 4>}, {transform_indices = @transform_2, window_bounds = array<i64: 1, 1, 8, 256>}, {transform_indices = @transform_3, window_bounds = array<i64: 1, 1, 1, 256>}, {transform_indices = @transform_4, window_bounds = array<i64: 1, 1, 8, 256>}, {transform_indices = @transform_5, window_bounds = array<i64: 1, 1, 8, 256>}]} {
    %0 = arith.index_cast %arg0 : i32 to index
    %1 = memref.load %arg4[%0] : memref<4xi32, #tpu.memory_space<smem>>
    %c1_i32 = arith.constant 1 : i32
    %2 = arith.cmpi eq, %1, %c1_i32 : i32
    %3 = arith.index_cast %arg0 : i32 to index
    %4 = memref.load %arg7[%3] : memref<4xi32, #tpu.memory_space<smem>>
    %c1_i32_0 = arith.constant 1 : i32
    %5 = arith.cmpi eq, %4, %c1_i32_0 : i32
    %c0 = arith.constant 0 : index
    %c0_1 = arith.constant 0 : index
    %c0_2 = arith.constant 0 : index
    %c0_3 = arith.constant 0 : index
    %6 = vector.load %arg10[%c0, %c0_1, %c0_2, %c0_3] : memref<1x1x8x256xf32, #tpu.memory_space<vmem>>, vector<1x1x8x256xf32>
    %c0_4 = arith.constant 0 : index
    %c0_5 = arith.constant 0 : index
    %c0_6 = arith.constant 0 : index
    %c0_7 = arith.constant 0 : index
    %7 = vector.load %arg11[%c0_4, %c0_5, %c0_6, %c0_7] : memref<1x1x1x256xf32, #tpu.memory_space<vmem>>, vector<1x1x1x256xf32>
    %8 = vector.shape_cast %7 : vector<1x1x1x256xf32> to vector<1x1x1x256xf32>
    %9 = vector.broadcast %8 : vector<1x1x1x256xf32> to vector<1x1x8x256xf32>
    %c0_8 = arith.constant 0 : index
    %c0_9 = arith.constant 0 : index
    %c0_10 = arith.constant 0 : index
    %c0_11 = arith.constant 0 : index
    %10 = vector.load %arg12[%c0_8, %c0_9, %c0_10, %c0_11] : memref<1x1x8x256xf32, #tpu.memory_space<vmem>>, vector<1x1x8x256xf32>
    %11 = arith.select %2, %10, %9 : vector<1x1x8x256xf32>
    %12 = arith.extui %5 : i1 to i32
    %c0_i32 = arith.constant 0 : i32
    %13 = arith.cmpi ne, %12, %c0_i32 : i32
    scf.if %13 {
      %cst = arith.constant 0.000000e+00 : f32
      %cst_13 = arith.constant 1.000000e+00 : f32
      %17 = vector.broadcast %cst : f32 to vector<1x1x8x256xf32>
      %18 = arith.maximumf %17, %6 : vector<1x1x8x256xf32>
      %19 = vector.broadcast %cst_13 : f32 to vector<1x1x8x256xf32>
      %20 = arith.minimumf %19, %18 : vector<1x1x8x256xf32>
      %cst_14 = arith.constant 0.000000e+00 : f32
      %cst_15 = arith.constant 1.000000e+00 : f32
      %21 = vector.broadcast %cst_14 : f32 to vector<1x1x8x256xf32>
      %22 = arith.maximumf %21, %11 : vector<1x1x8x256xf32>
      %23 = vector.broadcast %cst_15 : f32 to vector<1x1x8x256xf32>
      %24 = arith.minimumf %23, %22 : vector<1x1x8x256xf32>
      %25 = arith.index_cast %arg0 : i32 to index
      %26 = memref.load %arg8[%25] : memref<4xf32, #tpu.memory_space<smem>>
      %27 = arith.index_cast %arg0 : i32 to index
      %28 = memref.load %arg9[%27] : memref<4xf32, #tpu.memory_space<smem>>
      %29 = math.sqrt %20 : vector<1x1x8x256xf32>
      %30 = arith.mulf %20, %29 : vector<1x1x8x256xf32>
      %31 = math.sqrt %30 : vector<1x1x8x256xf32>
      %32 = math.sqrt %24 : vector<1x1x8x256xf32>
      %33 = arith.mulf %24, %32 : vector<1x1x8x256xf32>
      %34 = math.sqrt %33 : vector<1x1x8x256xf32>
      %cst_16 = arith.constant 1.000000e+00 : f32
      %35 = arith.subf %cst_16, %26 : f32
      %36 = vector.broadcast %35 : f32 to vector<1x1x8x256xf32>
      %37 = arith.mulf %36, %31 : vector<1x1x8x256xf32>
      %38 = vector.broadcast %26 : f32 to vector<1x1x8x256xf32>
      %39 = arith.mulf %38, %34 : vector<1x1x8x256xf32>
      %40 = arith.addf %37, %39 : vector<1x1x8x256xf32>
      %cst_17 = arith.constant 0.000000e+00 : f32
      %cst_18 = arith.constant 1.000000e+00 : f32
      %41 = vector.broadcast %cst_17 : f32 to vector<1x1x8x256xf32>
      %42 = arith.maximumf %41, %40 : vector<1x1x8x256xf32>
      %43 = vector.broadcast %cst_18 : f32 to vector<1x1x8x256xf32>
      %44 = arith.minimumf %43, %42 : vector<1x1x8x256xf32>
      %45 = math.log %44 : vector<1x1x8x256xf32>
      %46 = vector.broadcast %28 : f32 to vector<1x1x8x256xf32>
      %47 = arith.mulf %46, %45 : vector<1x1x8x256xf32>
      %48 = math.exp %47 : vector<1x1x8x256xf32>
      %c0_19 = arith.constant 0 : index
      %c0_20 = arith.constant 0 : index
      %c0_21 = arith.constant 0 : index
      %c0_22 = arith.constant 0 : index
      %49 = vector.load %arg13[%c0_19, %c0_20, %c0_21, %c0_22] : memref<1x1x8x256xf32, #tpu.memory_space<vmem>>, vector<1x1x8x256xf32>
      tpu.vector_store %arg13[%c0_19, %c0_20, %c0_21, %c0_22], %48 {strides = array<i32>} : memref<1x1x8x256xf32, #tpu.memory_space<vmem>>, vector<1x1x8x256xf32>,
    } else {
    }
    %true = arith.constant true
    %14 = arith.xori %5, %true : i1
    %15 = arith.extui %14 : i1 to i32
    %c0_i32_12 = arith.constant 0 : i32
    %16 = arith.cmpi ne, %15, %c0_i32_12 : i32
    scf.if %16 {
      %17 = arith.maximumf %6, %11 : vector<1x1x8x256xf32>
      %cst = arith.constant 0.000000e+00 : f32
      %cst_13 = arith.constant 1.000000e+00 : f32
      %18 = vector.broadcast %cst : f32 to vector<1x1x8x256xf32>
      %19 = arith.maximumf %18, %17 : vector<1x1x8x256xf32>
      %20 = vector.broadcast %cst_13 : f32 to vector<1x1x8x256xf32>
      %21 = arith.minimumf %20, %19 : vector<1x1x8x256xf32>
      %c0_14 = arith.constant 0 : index
      %c0_15 = arith.constant 0 : index
      %c0_16 = arith.constant 0 : index
      %c0_17 = arith.constant 0 : index
      %22 = vector.load %arg13[%c0_14, %c0_15, %c0_16, %c0_17] : memref<1x1x8x256xf32, #tpu.memory_space<vmem>>, vector<1x1x8x256xf32>
      tpu.vector_store %arg13[%c0_14, %c0_15, %c0_16, %c0_17], %21 {strides = array<i32>} : memref<1x1x8x256xf32, #tpu.memory_space<vmem>>, vector<1x1x8x256xf32>,
    } else {
    }
    return
  }
  func.func @transform_0(%arg0: i32, %arg1: i32, %arg2: i32, %arg3: i32, %arg4: memref<4xi32, #tpu.memory_space<smem>>, %arg5: memref<4xi32, #tpu.memory_space<smem>>, %arg6: memref<4xi32, #tpu.memory_space<smem>>, %arg7: memref<4xi32, #tpu.memory_space<smem>>) -> i32 {
    %c0_i32 = arith.constant 0 : i32
    %c0_i32_0 = arith.constant 0 : i32
    return %c0_i32 : i32
  }
  func.func @transform_1(%arg0: i32, %arg1: i32, %arg2: i32, %arg3: i32, %arg4: memref<4xi32, #tpu.memory_space<smem>>, %arg5: memref<4xi32, #tpu.memory_space<smem>>, %arg6: memref<4xi32, #tpu.memory_space<smem>>, %arg7: memref<4xi32, #tpu.memory_space<smem>>) -> i32 {
    %c0_i32 = arith.constant 0 : i32
    %c0_i32_0 = arith.constant 0 : i32
    return %c0_i32 : i32
  }
  func.func @transform_2(%arg0: i32, %arg1: i32, %arg2: i32, %arg3: i32, %arg4: memref<4xi32, #tpu.memory_space<smem>>, %arg5: memref<4xi32, #tpu.memory_space<smem>>, %arg6: memref<4xi32, #tpu.memory_space<smem>>, %arg7: memref<4xi32, #tpu.memory_space<smem>>) -> (i32, i32, i32, i32) {
    %c0_i32 = arith.constant 0 : i32
    return %arg0, %arg1, %arg3, %arg2 : i32, i32, i32, i32
  }
  func.func @transform_3(%arg0: i32, %arg1: i32, %arg2: i32, %arg3: i32, %arg4: memref<4xi32, #tpu.memory_space<smem>>, %arg5: memref<4xi32, #tpu.memory_space<smem>>, %arg6: memref<4xi32, #tpu.memory_space<smem>>, %arg7: memref<4xi32, #tpu.memory_space<smem>>) -> (i32, i32, i32, i32) {
    %0 = arith.index_cast %arg0 : i32 to index
    %1 = memref.load %arg5[%0] : memref<4xi32, #tpu.memory_space<smem>>
    %c0_i32 = arith.constant 0 : i32
    %c0_i32_0 = arith.constant 0 : i32
    return %1, %arg1, %c0_i32, %arg2 : i32, i32, i32, i32
  }
  func.func @transform_4(%arg0: i32, %arg1: i32, %arg2: i32, %arg3: i32, %arg4: memref<4xi32, #tpu.memory_space<smem>>, %arg5: memref<4xi32, #tpu.memory_space<smem>>, %arg6: memref<4xi32, #tpu.memory_space<smem>>, %arg7: memref<4xi32, #tpu.memory_space<smem>>) -> (i32, i32, i32, i32) {
    %0 = arith.index_cast %arg0 : i32 to index
    %1 = memref.load %arg4[%0] : memref<4xi32, #tpu.memory_space<smem>>
    %2 = arith.index_cast %arg0 : i32 to index
    %3 = memref.load %arg6[%2] : memref<4xi32, #tpu.memory_space<smem>>
    %4 = arith.muli %arg1, %1 : i32
    %5 = arith.muli %arg3, %1 : i32
    %6 = arith.muli %arg2, %1 : i32
    %c0_i32 = arith.constant 0 : i32
    return %3, %4, %5, %6 : i32, i32, i32, i32
  }
  func.func @transform_5(%arg0: i32, %arg1: i32, %arg2: i32, %arg3: i32, %arg4: memref<4xi32, #tpu.memory_space<smem>>, %arg5: memref<4xi32, #tpu.memory_space<smem>>, %arg6: memref<4xi32, #tpu.memory_space<smem>>, %arg7: memref<4xi32, #tpu.memory_space<smem>>) -> (i32, i32, i32, i32) {
    %c0_i32 = arith.constant 0 : i32
    return %arg0, %arg1, %arg3, %arg2 : i32, i32, i32, i32
  }
}

</mosaic_0001>

<llo_original>
// kernel: mix_background_pallas.1
$region0: #{mix_background_pallas.1}
  #allocation0 [shape = 'u32[]', space=smem, size = 0x4, offset = 0x4, fixed_abs, tag = 'smem constant byte address 0x4 - core index']
  #allocation1 [shape = 'u32[144,128]{1,0:T(1,128)}', space=vmem, size = 0x12000, scoped, tag = 'internal scratch']
  #allocation2 [shape = 's32[1]{0}', space=sflag, size = 0x4, scoped, tag = 'scoped memory for mix_background_pallas.1']
  #allocation3 [shape = 'u8[512]{0}', space=smem, size = 0x200, scoped, tag = 'prefetched SMEM operand 0']
  #allocation4 [shape = 'u8[512]{0}', space=smem, size = 0x200, scoped, tag = 'prefetched SMEM operand 1']
  #allocation5 [shape = 'u8[512]{0}', space=smem, size = 0x200, scoped, tag = 'prefetched SMEM operand 2']
  #allocation6 [shape = 'u8[512]{0}', space=smem, size = 0x200, scoped, tag = 'prefetched SMEM operand 3']
  %s0 = inlined_call_operand.hbm [shape: s32[4], index: 0, kind: input, shape index: {}]
  %s1 = inlined_call_operand.hbm [shape: s32[4], index: 1, kind: input, shape index: {}]
  %s2 = inlined_call_operand.hbm [shape: s32[4], index: 2, kind: input, shape index: {}]
  %s3 = inlined_call_operand.hbm [shape: s32[4], index: 3, kind: input, shape index: {}]
  %s4 = inlined_call_operand.hbm [shape: f32[4], index: 4, kind: input, shape index: {}]
  %s5 = inlined_call_operand.hbm [shape: f32[4], index: 5, kind: input, shape index: {}]
  %s6 = inlined_call_operand.hbm [shape: f32[4,3,8,256], index: 6, kind: input, shape index: {}]
  %s7 = inlined_call_operand.vmem [shape: f32[2,3,1,256], index: 7, kind: input, shape index: {}]
  %s8 = inlined_call_operand.hbm [shape: f32[2,3,8,256], index: 8, kind: input, shape index: {}]
  %s9 = inlined_call_operand.hbm [shape: f32[4,3,8,256], index: 9, kind: output, shape index: {}]
  %s10 = sld [smem:[#allocation0]]
  $region77: #{mix_background_pallas.1} parent=0
    _
  %s12 = ssub.s32 1, %s10
  %s13 = scalar_select 0, %s12, %s10
  %15 = dma.hbm_to_smem %s0, 16, [#allocation3], [#allocation2]
  %17 = dma.hbm_to_smem %s1, 16, [#allocation4], [#allocation2]
  %19 = dma.hbm_to_smem %s2, 16, [#allocation5], [#allocation2]
  %21 = dma.hbm_to_smem %s3, 16, [#allocation6], [#allocation2]
  %22 = dma.done [#allocation2], 64
  %23 = sfence
  $region1: #{mix_background_pallas.1} parent=0
    #allocation7 [shape = 'u8[512]{0}', space=smem, size = 0x200, scoped, tag = 'input window, operand 4, single buffered']
    #allocation8 [shape = 's32[2]{0}', space=sflag, size = 0x8, scoped, tag = 'scoped memory for mix_background_pallas.1']
    #allocation9 [shape = 's32[2]{0}', space=sflag, size = 0x8, scoped, tag = 'scoped memory for mix_background_pallas.1']
    #allocation10 [shape = 's32[2]{0}', space=sflag, size = 0x8, scoped, tag = 'scoped memory for mix_background_pallas.1']
    #allocation11 [shape = 'u8[512]{0}', space=smem, size = 0x200, scoped, tag = 'input window, operand 5, single buffered']
    #allocation12 [shape = 's32[1]{0}', space=sflag, size = 0x4, scoped, tag = 'scoped memory for mix_background_pallas.1']
    #allocation13 [shape = 'u8[16384]{0}', space=vmem, size = 0x4000, scoped, tag = 'input window, operand 6']
    #allocation14 [shape = 'u8[16384]{0}', space=vmem, size = 0x4000, scoped, tag = 'input window, operand 8']
    #allocation15 [shape = 's32[2]{0}', space=sflag, size = 0x8, scoped, tag = 'scoped memory for mix_background_pallas.1']
    #allocation16 [shape = 'u8[16384]{0}', space=vmem, size = 0x4000, scoped, tag = 'output window, operand 0']
    %24 = vsyncpa [#allocation10], 0
    %25 = vsyncpa [#allocation12], 0
    %26 = vsyncpa [#allocation8], 0
    %s27 = scalar_lea.sflag [#allocation8], 1
    %28 = vsyncpa %s27, 0
    %29 = vsyncpa [#allocation15], 0
    %s30 = scalar_lea.sflag [#allocation15], 1
    %31 = vsyncpa %s30, 0
    %32 = vsyncpa [#allocation9], 0
    %s33 = scalar_lea.sflag [#allocation9], 1
    %34 = vsyncpa %s33, 0
    loop: start=0, step=1, limit=14
    $region2: #{mix_background_pallas.1} parent=1 // loop_pre_header
      _
    $region3: #{mix_background_pallas.1} parent=1 // loop_header
      %s36 = sphi 0, %s40
      %p37 = scmp.ge.s32.totalorder %s36, 14
      %s43 = sphi 0, %s69
      %s44 = sphi 0, %s65
      %s45 = sphi 0, %s61
      %s46 = sphi 0, %s57
      %s47 = sphi 0, %s43
      %s48 = sphi 0, %s44
      %s49 = sphi 0, %s45
      %s50 = sphi 0, %s46
      %s51 = sphi 0, %s47
      %s52 = sphi 0, %s48
      %s53 = sphi 0, %s49
      %s54 = sphi 0, %s50
      %s70 = sphi 0, %s70
      %s72 = sphi 0, %s70
      %s73 = sphi 0, %s72
      %s87 = sphi 0, %s73
      %s91 = sphi 0, %s91
      %s93 = sphi 0, %s91
      %s94 = sphi 0, %s93
      %s108 = sphi 0, %s94
      %s120 = sphi 0, %s122
      %s123 = sphi 0, %s120
      %s124 = sphi 0, %s123
      %s140 = sphi 0, %s124
      %s152 = sphi 0, %s154
      %s155 = sphi 0, %s152
      %s156 = sphi 0, %s155
      %s172 = sphi 0, %s156
      %s194 = sphi 0, %s196
      %s197 = sphi 0, %s194
      %s198 = sphi 0, %s197
      %s214 = sphi 0, %s198
      %s226 = sphi 0, %s228
      %s229 = sphi 0, %s226
      %s230 = sphi 0, %s229
      %s246 = sphi 0, %s230
    $region4: #{mix_background_pallas.1} parent=1 // loop_header_branch
      %39 = sbr.rel (%p37) target = $region8
    $region5: #{mix_background_pallas.1} parent=1 // loop_body
      %s41 = ssub.s32 %s36, 1
      %s42 = ssub.s32 %s36, 2
      %s55 = sadd.s32 1, %s46
      %p56 = scmp.ge.s32.totalorder %s55, 1
      %s57 = scalar_select %p56, 0, %s55
      %s58 = sadd.s32 1, %s45
      %s59 = scalar_select %p56, %s58, %s45
      %p60 = scmp.ge.s32.totalorder %s59, 1
      %s61 = scalar_select %p60, 0, %s59
      %s62 = sadd.s32 1, %s44
      %s63 = scalar_select %p60, %s62, %s44
      %p64 = scmp.ge.s32.totalorder %s63, 3
      %s65 = scalar_select %p64, 0, %s63
      %s66 = sadd.s32 1, %s43
      %s67 = scalar_select %p64, %s66, %s43
      %p68 = scmp.ge.s32.totalorder %s67, 4
      %s69 = scalar_select %p68, 0, %s67
      %s71 = sadd.s32 %s70, 1
      %p74 = scmp.eq.s32.totalorder %s36, 11
      %p75 = scmp.ne.s32.totalorder %s70, %s72
      %p76 = scmp.eq.s32.totalorder %s36, 0
      %p77 = por %p75, %p76
      %p78 = scmp.ne.s32.totalorder %s70, %s72
      %p79 = scmp.eq.s32.totalorder %s41, 11
      %p80 = por %p78, %p79
      %p81 = scmp.ne.s32.totalorder %s72, %s73
      %p82 = scmp.eq.s32.totalorder %s41, 0
      %p83 = por %p81, %p82
      %p84 = scmp.ne.s32.totalorder %s72, %s73
      %p85 = scmp.eq.s32.totalorder %s42, 11
      %p86 = por %p84, %p85
      %p88 = scmp.ne.s32.totalorder %s73, %s87
      %p89 = scmp.eq.s32.totalorder %s42, 0
      %p90 = por %p88, %p89
      %s92 = sadd.s32 %s91, 1
      %p95 = scmp.eq.s32.totalorder %s36, 11
      %p96 = scmp.ne.s32.totalorder %s91, %s93
      %p97 = scmp.eq.s32.totalorder %s36, 0
      %p98 = por %p96, %p97
      %p99 = scmp.ne.s32.totalorder %s91, %s93
      %p100 = scmp.eq.s32.totalorder %s41, 11
      %p101 = por %p99, %p100
      %p102 = scmp.ne.s32.totalorder %s93, %s94
      %p103 = scmp.eq.s32.totalorder %s41, 0
      %p104 = por %p102, %p103
      %p105 = scmp.ne.s32.totalorder %s93, %s94
      %p106 = scmp.eq.s32.totalorder %s42, 11
      %p107 = por %p105, %p106
      %p109 = scmp.ne.s32.totalorder %s94, %s108
      %p110 = scmp.eq.s32.totalorder %s42, 0
      %p111 = por %p109, %p110
      %s112 = ssub.s32 %s43, %s69
      %s113 = ssub.s32 %s44, %s65
      %s114 = sor.u32 %s112, %s113
      %s115 = ssub.s32 %s46, %s57
      %s116 = sor.u32 %s114, %s115
      %s117 = ssub.s32 %s45, %s61
      %s118 = sor.u32 %s116, %s117
      %p119 = scmp.eq.s32.totalorder %s118, 0
      %s121 = sadd.s32 %s120, 1
      %s122 = scalar_select %p119, %s120, %s121
      %p125 = pneg %p119
      %p126 = scmp.eq.s32.totalorder %s36, 11
      %p127 = por %p125, %p126
      %p128 = scmp.ne.s32.totalorder %s120, %s123
      %p129 = scmp.eq.s32.totalorder %s36, 0
      %p130 = por %p128, %p129
      %p131 = scmp.ne.s32.totalorder %s120, %s123
      %p132 = scmp.eq.s32.totalorder %s41, 11
      %p133 = por %p131, %p132
      %p134 = scmp.ne.s32.totalorder %s123, %s124
      %p135 = scmp.eq.s32.totalorder %s41, 0
      %p136 = por %p134, %p135
      %p137 = scmp.ne.s32.totalorder %s123, %s124
      %p138 = scmp.eq.s32.totalorder %s42, 11
      %p139 = por %p137, %p138
      %p141 = scmp.ne.s32.totalorder %s124, %s140
      %p142 = scmp.eq.s32.totalorder %s42, 0
      %p143 = por %p141, %p142
      %s144 = sld [smem:[#allocation4 + %s43]]
      %s145 = sld [smem:[#allocation4 + %s69]]
      %s146 = ssub.s32 %s144, %s145
      %s147 = ssub.s32 %s44, %s65
      %s148 = sor.u32 %s146, %s147
      %s149 = ssub.s32 %s45, %s61
      %s150 = sor.u32 %s148, %s149
      %p151 = scmp.eq.s32.totalorder %s150, 0
      %s153 = sadd.s32 %s152, 1
      %s154 = scalar_select %p151, %s152, %s153
      %p157 = pneg %p151
      %p158 = scmp.eq.s32.totalorder %s36, 11
      %p159 = por %p157, %p158
      %p160 = scmp.ne.s32.totalorder %s152, %s155
      %p161 = scmp.eq.s32.totalorder %s36, 0
      %p162 = por %p160, %p161
      %p163 = scmp.ne.s32.totalorder %s152, %s155
      %p164 = scmp.eq.s32.totalorder %s41, 11
      %p165 = por %p163, %p164
      %p166 = scmp.ne.s32.totalorder %s155, %s156
      %p167 = scmp.eq.s32.totalorder %s41, 0
      %p168 = por %p166, %p167
      %p169 = scmp.ne.s32.totalorder %s155, %s156
      %p170 = scmp.eq.s32.totalorder %s42, 11
      %p171 = por %p169, %p170
      %p173 = scmp.ne.s32.totalorder %s156, %s172
      %p174 = scmp.eq.s32.totalorder %s42, 0
      %p175 = por %p173, %p174
      %s176 = sld [smem:[#allocation3 + %s43]]
      %s177 = sld [smem:[#allocation5 + %s43]]
      %s178 = smul.u32 %s44, %s176
      %s179 = smul.u32 %s46, %s176
      %s180 = smul.u32 %s45, %s176
      %s181 = sld [smem:[#allocation3 + %s69]]
      %s182 = sld [smem:[#allocation5 + %s69]]
      %s183 = smul.u32 %s65, %s181
      %s184 = smul.u32 %s57, %s181
      %s185 = smul.u32 %s61, %s181
      %s186 = ssub.s32 %s177, %s182
      %s187 = ssub.s32 %s178, %s183
      %s188 = sor.u32 %s186, %s187
      %s189 = ssub.s32 %s179, %s184
      %s190 = sor.u32 %s188, %s189
      %s191 = ssub.s32 %s180, %s185
      %s192 = sor.u32 %s190, %s191
      %p193 = scmp.eq.s32.totalorder %s192, 0
      %s195 = sadd.s32 %s194, 1
      %s196 = scalar_select %p193, %s194, %s195
      %p199 = pneg %p193
      %p200 = scmp.eq.s32.totalorder %s36, 11
      %p201 = por %p199, %p200
      %p202 = scmp.ne.s32.totalorder %s194, %s197
      %p203 = scmp.eq.s32.totalorder %s36, 0
      %p204 = por %p202, %p203
      %p205 = scmp.ne.s32.totalorder %s194, %s197
      %p206 = scmp.eq.s32.totalorder %s41, 11
      %p207 = por %p205, %p206
      %p208 = scmp.ne.s32.totalorder %s197, %s198
      %p209 = scmp.eq.s32.totalorder %s41, 0
      %p210 = por %p208, %p209
      %p211 = scmp.ne.s32.totalorder %s197, %s198
      %p212 = scmp.eq.s32.totalorder %s42, 11
      %p213 = por %p211, %p212
      %p215 = scmp.ne.s32.totalorder %s198, %s214
      %p216 = scmp.eq.s32.totalorder %s42, 0
      %p217 = por %p215, %p216
      %s218 = ssub.s32 %s43, %s69
      %s219 = ssub.s32 %s44, %s65
      %s220 = sor.u32 %s218, %s219
      %s221 = ssub.s32 %s46, %s57
      %s222 = sor.u32 %s220, %s221
      %s223 = ssub.s32 %s45, %s61
      %s224 = sor.u32 %s222, %s223
      %p225 = scmp.eq.s32.totalorder %s224, 0
      %s227 = sadd.s32 %s226, 1
      %s228 = scalar_select %p225, %s226, %s227
      %p231 = pneg %p225
      %p232 = scmp.eq.s32.totalorder %s36, 11
      %p233 = por %p231, %p232
      %p234 = scmp.ne.s32.totalorder %s226, %s229
      %p235 = scmp.eq.s32.totalorder %s36, 0
      %p236 = por %p234, %p235
      %p237 = scmp.ne.s32.totalorder %s226, %s229
      %p238 = scmp.eq.s32.totalorder %s41, 11
      %p239 = por %p237, %p238
      %p240 = scmp.ne.s32.totalorder %s229, %s230
      %p241 = scmp.eq.s32.totalorder %s41, 0
      %p242 = por %p240, %p241
      %p243 = scmp.ne.s32.totalorder %s229, %s230
      %p244 = scmp.eq.s32.totalorder %s42, 11
      %p245 = por %p243, %p244
      %p247 = scmp.ne.s32.totalorder %s230, %s246
      %p248 = scmp.eq.s32.totalorder %s42, 0
      %p249 = por %p247, %p248
      %p250 = scmp.le.s32.totalorder 1, %s36
      %p251 = scmp.lt.s32.totalorder %s36, 13
      %p252 = pnand %p250, %p251
      %p253 = pneg %p252
      // Predicated region
      $region9: #{mix_background_pallas.1} parent=5 // pred_check
        _
      $region10: #{mix_background_pallas.1} parent=5 // pred_check_branch
        %255 = sbr.rel (%p252) target = $region12
      $region11: #{mix_background_pallas.1} parent=5 // pred_region
        %s256 = ssub.s32 %s36, 1
        // Predicated region
        $region13: #{mix_background_pallas.1} parent=11 // pred_check
          %p257 = pneg %p83
        $region14: #{mix_background_pallas.1} parent=11 // pred_check_branch
          %259 = sbr.rel (%p257) target = $region16
        $region15: #{mix_background_pallas.1} parent=11 // pred_region
          %s261 = ssub.s32 16, 16
          %262 = vsyncadd [#allocation10], %s261
          %265 = dma.hbm_to_smem %s4, 16, [#allocation7], [#allocation10]
        $region16: #{mix_background_pallas.1} parent=11 // pred_fallthru
          _
        // Predicated region
        $region17: #{mix_background_pallas.1} parent=11 // pred_check
          %p266 = pneg %p104
        $region18: #{mix_background_pallas.1} parent=11 // pred_check_branch
          %268 = sbr.rel (%p266) target = $region20
        $region19: #{mix_background_pallas.1} parent=11 // pred_region
          %s270 = ssub.s32 16, 16
          %271 = vsyncadd [#allocation12], %s270
          %274 = dma.hbm_to_smem %s5, 16, [#allocation11], [#allocation12]
        $region20: #{mix_background_pallas.1} parent=11 // pred_fallthru
          _
      $region12: #{mix_background_pallas.1} parent=5 // pred_fallthru
        _
      %p275 = scmp.lt.s32.totalorder %s36, 12
      // Predicated region
      $region21: #{mix_background_pallas.1} parent=5 // pred_check
        %p276 = pneg %p275
      $region22: #{mix_background_pallas.1} parent=5 // pred_check_branch
        %278 = sbr.rel (%p276) target = $region24
      $region23: #{mix_background_pallas.1} parent=5 // pred_region
        // Predicated region
        $region25: #{mix_background_pallas.1} parent=23 // pred_check
          %p279 = pneg %p130
        $region26: #{mix_background_pallas.1} parent=23 // pred_check_branch
          %281 = sbr.rel (%p279) target = $region28
        $region27: #{mix_background_pallas.1} parent=23 // pred_region
          %s282 = sand.u32 %s120, 1
          %s283 = scalar_lea.sflag [#allocation8], %s282
          %s284 = sand.u32 %s120, 1
          %s285 = smul.addr %s284, 16
          %s286 = scalar_lea.vmem [#allocation13], %s285
          %s287 = smul.u32 2, %s45
          %s289 = ssub.s32 256, 256
          %290 = vsyncadd %s283, %s289
          %s291 = smul.addr %s46, 2
          %s292 = sadd.s32 %s287, %s291
          %s293 = smul.addr %s44, 2
          %s294 = sadd.s32 %s292, %s293
          %s295 = smul.addr %s43, 6
          %s296 = sadd.s32 %s294, %s295
          %s297 = smul.addr %s296, 128
          %s298 = scalar_lea.hbm %s6, %s297
          %s300 = sshll.u32 %s286, 4
          %s301 = int_to_ptr.vmem [resolvable:$true] %s300
          %303 = dma.hbm_to_vmem [thread:$0]  %s298, 256, %s301, %s283
        $region28: #{mix_background_pallas.1} parent=23 // pred_fallthru
          _
        // Predicated region
        $region29: #{mix_background_pallas.1} parent=23 // pred_check
          %p304 = pneg %p162
        $region30: #{mix_background_pallas.1} parent=23 // pred_check_branch
          %306 = sbr.rel (%p304) target = $region32
        $region31: #{mix_background_pallas.1} parent=23 // pred_region
          %s307 = sld [smem:[#allocation4 + %s43]]
          %s308 = smul.u32 2, %s45
          %p309 = scmp.lt.s32.totalorder %s307, 1
          %s310 = scalar_select %p309, %s307, 1
          %p311 = scmp.lt.s32.totalorder %s44, 2
          %s312 = scalar_select %p311, %s44, 2
          %p313 = scmp.lt.s32.totalorder %s308, 1
          %s314 = scalar_select %p313, %s308, 1
          %s315 = smul.addr %s312, 2
          %s316 = sadd.s32 %s314, %s315
          %s317 = smul.addr %s310, 6
          %s318 = sadd.s32 %s316, %s317
          %s319 = scalar_lea.vmem %s7, %s318
          %s320 = sld [smem:[#allocation4 + %s43]]
          %s321 = smul.u32 2, %s45
        $region32: #{mix_background_pallas.1} parent=23 // pred_fallthru
          _
        // Predicated region
        $region33: #{mix_background_pallas.1} parent=23 // pred_check
          %p322 = pneg %p204
        $region34: #{mix_background_pallas.1} parent=23 // pred_check_branch
          %324 = sbr.rel (%p322) target = $region36
        $region35: #{mix_background_pallas.1} parent=23 // pred_region
          %s325 = sand.u32 %s194, 1
          %s326 = scalar_lea.sflag [#allocation15], %s325
          %s327 = sand.u32 %s194, 1
          %s328 = smul.addr %s327, 16
          %s329 = scalar_lea.vmem [#allocation14], %s328
          %s330 = sld [smem:[#allocation3 + %s43]]
          %s331 = sld [smem:[#allocation5 + %s43]]
          %s332 = smul.u32 %s44, %s330
          %s333 = smul.u32 %s46, %s330
          %s334 = smul.u32 %s45, %s330
          %s335 = smul.u32 2, %s334
          %s337 = ssub.s32 256, 256
          %338 = vsyncadd %s326, %s337
          %s339 = smul.addr %s333, 2
          %s340 = sadd.s32 %s335, %s339
          %s341 = smul.addr %s332, 2
          %s342 = sadd.s32 %s340, %s341
          %s343 = smul.addr %s331, 6
          %s344 = sadd.s32 %s342, %s343
          %s345 = smul.addr %s344, 128
          %s346 = scalar_lea.hbm %s8, %s345
          %s348 = sshll.u32 %s329, 4
          %s349 = int_to_ptr.vmem [resolvable:$true] %s348
          %351 = dma.hbm_to_vmem [thread:$0]  %s346, 256, %s349, %s326
        $region36: #{mix_background_pallas.1} parent=23 // pred_fallthru
          _
      $region24: #{mix_background_pallas.1} parent=5 // pred_fallthru
        _
      %p352 = scmp.le.s32.totalorder 1, %s36
      %p353 = scmp.lt.s32.totalorder %s36, 13
      %p354 = pnand %p352, %p353
      %p355 = pneg %p354
      // Predicated region
      $region37: #{mix_background_pallas.1} parent=5 // pred_check
        _
      $region38: #{mix_background_pallas.1} parent=5 // pred_check_branch
        %357 = sbr.rel (%p354) target = $region40
      $region39: #{mix_background_pallas.1} parent=5 // pred_region
        %s358 = ssub.s32 %s36, 1
        // Predicated region
        $region41: #{mix_background_pallas.1} parent=39 // pred_check
          %p359 = pneg %p83
        $region42: #{mix_background_pallas.1} parent=39 // pred_check_branch
          %361 = sbr.rel (%p359) target = $region44
        $region43: #{mix_background_pallas.1} parent=39 // pred_region
          %362 = dma.done [#allocation10], 16
        $region44: #{mix_background_pallas.1} parent=39 // pred_fallthru
          _
        // Predicated region
        $region45: #{mix_background_pallas.1} parent=39 // pred_check
          %p363 = pneg %p104
        $region46: #{mix_background_pallas.1} parent=39 // pred_check_branch
          %365 = sbr.rel (%p363) target = $region48
        $region47: #{mix_background_pallas.1} parent=39 // pred_region
          %366 = dma.done [#allocation12], 16
        $region48: #{mix_background_pallas.1} parent=39 // pred_fallthru
          _
        %s367 = sand.u32 %s123, 1
        %s368 = scalar_lea.sflag [#allocation8], %s367
        %s369 = sand.u32 %s123, 1
        %s370 = smul.addr %s369, 16
        %s371 = scalar_lea.vmem [#allocation13], %s370
        // Predicated region
        $region49: #{mix_background_pallas.1} parent=39 // pred_check
          %p372 = pneg %p136
        $region50: #{mix_background_pallas.1} parent=39 // pred_check_branch
          %374 = sbr.rel (%p372) target = $region52
        $region51: #{mix_background_pallas.1} parent=39 // pred_region
          %375 = dma.done %s368, 256
        $region52: #{mix_background_pallas.1} parent=39 // pred_fallthru
          _
        %s376 = sand.u32 %s197, 1
        %s377 = scalar_lea.sflag [#allocation15], %s376
        %s378 = sand.u32 %s197, 1
        %s379 = smul.addr %s378, 16
        %s380 = scalar_lea.vmem [#allocation14], %s379
        // Predicated region
        $region53: #{mix_background_pallas.1} parent=39 // pred_check
          %p381 = pneg %p210
        $region54: #{mix_background_pallas.1} parent=39 // pred_check_branch
          %383 = sbr.rel (%p381) target = $region56
        $region55: #{mix_background_pallas.1} parent=39 // pred_region
          %384 = dma.done %s377, 256
        $region56: #{mix_background_pallas.1} parent=39 // pred_fallthru
          _
        %385 = sfence
        %p386 = pneg %p83
        %p387 = pneg %p80
        %p388 = pneg %p104
        %p389 = pneg %p101
        %s390 = sand.u32 %s123, 1
        %s391 = scalar_lea.sflag [#allocation8], %s390
        %s392 = sand.u32 %s123, 1
        %s393 = smul.addr %s392, 16
        %s394 = scalar_lea.vmem [#allocation13], %s393
        %p395 = pneg %p136
        %p396 = pneg %p133
        %s397 = sld [smem:[#allocation4 + %s47]]
        %s398 = smul.u32 2, %s49
        %p399 = scmp.lt.s32.totalorder %s397, 1
        %s400 = scalar_select %p399, %s397, 1
        %p401 = scmp.lt.s32.totalorder %s48, 2
        %s402 = scalar_select %p401, %s48, 2
        %p403 = scmp.lt.s32.totalorder %s398, 1
        %s404 = scalar_select %p403, %s398, 1
        %s405 = smul.addr %s402, 2
        %s406 = sadd.s32 %s404, %s405
        %s407 = smul.addr %s400, 6
        %s408 = sadd.s32 %s406, %s407
        %s409 = scalar_lea.vmem %s7, %s408
        %p410 = pneg %p168
        %p411 = pneg %p165
        %s412 = sand.u32 %s197, 1
        %s413 = scalar_lea.sflag [#allocation15], %s412
        %s414 = sand.u32 %s197, 1
        %s415 = smul.addr %s414, 16
        %s416 = scalar_lea.vmem [#allocation14], %s415
        %p417 = pneg %p210
        %p418 = pneg %p207
        %p419 = pneg %p242
        %p420 = pneg %p239
        %s421 = sand.u32 %s229, 1
        %s422 = scalar_lea.sflag [#allocation9], %s421
        %s423 = sand.u32 %s229, 1
        %s424 = smul.addr %s423, 16
        %s425 = scalar_lea.vmem [#allocation16], %s424
        %s426 = smul.u32 2, %s49
        %s427 = sld [smem:[#allocation4 + %s47]]
        %s428 = smul.u32 2, %s49
        %p429 = scmp.lt.s32.totalorder %s427, 1
        %s430 = scalar_select %p429, %s427, 1
        %p431 = scmp.lt.s32.totalorder %s48, 2
        %s432 = scalar_select %p431, %s48, 2
        %p433 = scmp.lt.s32.totalorder %s428, 1
        %s434 = scalar_select %p433, %s428, 1
        %s435 = smul.addr %s432, 2
        %s436 = sadd.s32 %s434, %s435
        %s437 = smul.addr %s430, 6
        %s438 = sadd.s32 %s436, %s437
        %s439 = scalar_lea.vmem %s7, %s438
        %s440 = sld [smem:[#allocation4 + %s47]]
        %s441 = smul.u32 2, %s49
        %s442 = sld [smem:[#allocation3 + %s47]]
        %s443 = sld [smem:[#allocation5 + %s47]]
        %s444 = smul.u32 %s48, %s442
        %s445 = smul.u32 %s50, %s442
        %s446 = smul.u32 %s49, %s442
        %s447 = smul.u32 2, %s446
        %s448 = smul.u32 2, %s49
        %s449 = sld [smem:[#allocation3 + %s47]]
        %p450 = scmp.eq.s32.totalorder %s449, 1
        %s451 = sld [smem:[#allocation6 + %s47]]
        %p452 = scmp.eq.s32.totalorder %s451, 1
        %v453 = vld [vmem:[%s371] sm:$0xff]
        %v454 = vld [vmem:[%s371 + $0x8] sm:$0xff]
        %v455 = vld [vmem:[%s439] sm:$0x3]
        %v457 = vlaneseq
        %v458 = vshrl.u32 %v457, 7
        %v459 = vsub.s32 0, %v458
        %v460 = vrot.slane %v455, %v459
        %v461 = vlaneseq
        %v462 = vshrl.u32 %v461, 7
        %v463 = vsub.s32 1, %v462
        %v464 = vrot.slane %v455, %v463
        %v467 = vld [vmem:[%s380] sm:$0xff]
        %v468 = vld [vmem:[%s380 + $0x8] sm:$0xff]
        %s469 = scalar_select %p450, 1, 0
        %v470 = vstv %s469
        %vm471 = vcmp.eq.s32.totalorder %v470, 1
        %v472 = vsel %vm471, %v467, %v460
        %v473 = vsel %vm471, %v468, %v464
        // Predicated region
        $region57: #{mix_background_pallas.1} parent=39 // pred_check
          %p474 = pneg %p452
        $region58: #{mix_background_pallas.1} parent=39 // pred_check_branch
          %476 = sbr.rel (%p474) target = $region60
        $region59: #{mix_background_pallas.1} parent=39 // pred_region
          %v477 = vmax.f32 %v453, 0.0
          %v478 = vmax.f32 %v454, 0.0
          %v479 = vmin.f32 %v477, 1.0
          %v480 = vmin.f32 %v478, 1.0
          %v481 = vmax.f32 %v472, 0.0
          %v482 = vmax.f32 %v473, 0.0
          %v483 = vmin.f32 %v481, 1.0
          %v484 = vmin.f32 %v482, 1.0
          %s485 = sld [smem:[#allocation7 + %s47]]
          %s486 = sld [smem:[#allocation11 + %s47]]
          %v487 = vrsqrt.pop %v479
          %v488 = vmul.f32 %v479, %v487
          %vm489 = vcmp.eq.f32.partialorder %v479, inf
          %v490 = vsel %vm489, %v479, %v488
          %vm491 = vcmp.eq.f32.partialorder %v479, 0.0
          %v492 = vand.u32 %v479, 2147483648
          %v493 = vsel %vm491, %v492, %v490
          %v494 = vrsqrt.pop %v480
          %v495 = vmul.f32 %v480, %v494
          %vm496 = vcmp.eq.f32.partialorder %v480, inf
          %v497 = vsel %vm496, %v480, %v495
          %vm498 = vcmp.eq.f32.partialorder %v480, 0.0
          %v499 = vand.u32 %v480, 2147483648
          %v500 = vsel %vm498, %v499, %v497
          %v501 = vmul.f32 %v479, %v493
          %v502 = vmul.f32 %v480, %v500
          %v503 = vrsqrt.pop %v501
          %v504 = vmul.f32 %v501, %v503
          %vm505 = vcmp.eq.f32.partialorder %v501, inf
          %v506 = vsel %vm505, %v501, %v504
          %vm507 = vcmp.eq.f32.partialorder %v501, 0.0
          %v508 = vand.u32 %v501, 2147483648
          %v509 = vsel %vm507, %v508, %v506
          %v510 = vrsqrt.pop %v502
          %v511 = vmul.f32 %v502, %v510
          %vm512 = vcmp.eq.f32.partialorder %v502, inf
          %v513 = vsel %vm512, %v502, %v511
          %vm514 = vcmp.eq.f32.partialorder %v502, 0.0
          %v515 = vand.u32 %v502, 2147483648
          %v516 = vsel %vm514, %v515, %v513
          %v517 = vrsqrt.pop %v483
          %v518 = vmul.f32 %v483, %v517
          %vm519 = vcmp.eq.f32.partialorder %v483, inf
          %v520 = vsel %vm519, %v483, %v518
          %vm521 = vcmp.eq.f32.partialorder %v483, 0.0
          %v522 = vand.u32 %v483, 2147483648
          %v523 = vsel %vm521, %v522, %v520
          %v524 = vrsqrt.pop %v484
          %v525 = vmul.f32 %v484, %v524
          %vm526 = vcmp.eq.f32.partialorder %v484, inf
          %v527 = vsel %vm526, %v484, %v525
          %vm528 = vcmp.eq.f32.partialorder %v484, 0.0
          %v529 = vand.u32 %v484, 2147483648
          %v530 = vsel %vm528, %v529, %v527
          %v531 = vmul.f32 %v483, %v523
          %v532 = vmul.f32 %v484, %v530
          %v533 = vrsqrt.pop %v531
          %v534 = vmul.f32 %v531, %v533
          %vm535 = vcmp.eq.f32.partialorder %v531, inf
          %v536 = vsel %vm535, %v531, %v534
          %vm537 = vcmp.eq.f32.partialorder %v531, 0.0
          %v538 = vand.u32 %v531, 2147483648
          %v539 = vsel %vm537, %v538, %v536
          %v540 = vrsqrt.pop %v532
          %v541 = vmul.f32 %v532, %v540
          %vm542 = vcmp.eq.f32.partialorder %v532, inf
          %v543 = vsel %vm542, %v532, %v541
          %vm544 = vcmp.eq.f32.partialorder %v532, 0.0
          %v545 = vand.u32 %v532, 2147483648
          %v546 = vsel %vm544, %v545, %v543
          %s547 = ssub.f32 1.0, %s485
          %v548 = vstv %s547
          %v549 = vmul.f32 %v548, %v509
          %v550 = vmul.f32 %v548, %v516
          %v551 = vstv %s485
          %v552 = vmul.f32 %v551, %v539
          %v553 = vmul.f32 %v551, %v546
          %v554 = vadd.f32 %v549, %v552
          %v555 = vadd.f32 %v550, %v553
          %v556 = vmax.f32 %v554, 0.0
          %v557 = vmax.f32 %v555, 0.0
          %v558 = vmin.f32 %v556, 1.0
          %v559 = vmin.f32 %v557, 1.0
          %v560 = vlog2.pop %v558
          %v561 = vmul.f32 %v560, 0.6931472
          %v562 = vlog2.pop %v559
          %v563 = vmul.f32 %v562, 0.6931472
          %v564 = vstv %s486
          %v565 = vmul.f32 %v564, %v561
          %v566 = vmul.f32 %v564, %v563
          %v567 = vmul.f32 %v565, 1.442695
          %v568 = vpow.pop %v567
          %v569 = vmul.f32 %v566, 1.442695
          %v570 = vpow.pop %v569
          %571 = vst [vmem:[%s425] sm:$0xff] %v568
          %572 = vst [vmem:[%s425 + $0x8] sm:$0xff] %v570
        $region60: #{mix_background_pallas.1} parent=39 // pred_fallthru
          _
        %p573 = scmp.ne.s32.totalorder %s451, 1
        // Predicated region
        $region61: #{mix_background_pallas.1} parent=39 // pred_check
          %p574 = pneg %p573
        $region62: #{mix_background_pallas.1} parent=39 // pred_check_branch
          %576 = sbr.rel (%p574) target = $region64
        $region63: #{mix_background_pallas.1} parent=39 // pred_region
          %v577 = vmax.f32 %v453, %v472
          %v578 = vmax.f32 %v454, %v473
          %v579 = vmax.f32 %v577, 0.0
          %v580 = vmax.f32 %v578, 0.0
          %v581 = vmin.f32 %v579, 1.0
          %v582 = vmin.f32 %v580, 1.0
          %583 = vst [vmem:[%s425] sm:$0xff] %v581
          %584 = vst [vmem:[%s425 + $0x8] sm:$0xff] %v582
        $region64: #{mix_background_pallas.1} parent=39 // pred_fallthru
          _
        %s585 = sand.u32 %s229, 1
        %s586 = scalar_lea.sflag [#allocation9], %s585
        %s587 = sand.u32 %s229, 1
        %s588 = smul.addr %s587, 16
        %s589 = scalar_lea.vmem [#allocation16], %s588
        // Predicated region
        $region65: #{mix_background_pallas.1} parent=39 // pred_check
          %p590 = pneg %p239
        $region66: #{mix_background_pallas.1} parent=39 // pred_check_branch
          %592 = sbr.rel (%p590) target = $region68
        $region67: #{mix_background_pallas.1} parent=39 // pred_region
          %s593 = smul.u32 2, %s49
          %s595 = ssub.s32 256, 256
          %596 = vsyncadd %s586, %s595
          %s597 = smul.addr %s50, 2
          %s598 = sadd.s32 %s593, %s597
          %s599 = smul.addr %s48, 2
          %s600 = sadd.s32 %s598, %s599
          %s601 = smul.addr %s47, 6
          %s602 = sadd.s32 %s600, %s601
          %s603 = smul.addr %s602, 128
          %s604 = scalar_lea.hbm %s9, %s603
          %s606 = sshll.u32 %s589, 4
          %s607 = int_to_ptr.vmem [resolvable:$true] %s606
          %609 = dma.vmem_to_hbm [thread:$0]  %s607, 256, %s604, %s586
        $region68: #{mix_background_pallas.1} parent=39 // pred_fallthru
          _
      $region40: #{mix_background_pallas.1} parent=5 // pred_fallthru
        _
      %p610 = scmp.le.s32.totalorder 2, %s36
      // Predicated region
      $region69: #{mix_background_pallas.1} parent=5 // pred_check
        %p611 = pneg %p610
      $region70: #{mix_background_pallas.1} parent=5 // pred_check_branch
        %613 = sbr.rel (%p611) target = $region72
      $region71: #{mix_background_pallas.1} parent=5 // pred_region
        %s614 = ssub.s32 %s36, 2
        // Predicated region
        $region73: #{mix_background_pallas.1} parent=71 // pred_check
          %p615 = pneg %p245
        $region74: #{mix_background_pallas.1} parent=71 // pred_check_branch
          %617 = sbr.rel (%p615) target = $region76
        $region75: #{mix_background_pallas.1} parent=71 // pred_region
          %s618 = sand.u32 %s230, 1
          %s619 = scalar_lea.sflag [#allocation9], %s618
          %s620 = sand.u32 %s230, 1
          %s621 = smul.addr %s620, 16
          %s622 = scalar_lea.vmem [#allocation16], %s621
          %623 = dma.done %s619, 256
        $region76: #{mix_background_pallas.1} parent=71 // pred_fallthru
          _
      $region72: #{mix_background_pallas.1} parent=5 // pred_fallthru
        _
    $region6: #{mix_background_pallas.1} parent=1 // loop_footer
      %s40 = sadd.s32 1, %s36
    $region7: #{mix_background_pallas.1} parent=1 // loop_footer_branch
      %35 = sbr.rel target = $region3
    $region8: #{mix_background_pallas.1} parent=1 // loop_exit
      _
    %624 = vsyncpa [#allocation8], 1
    %s625 = scalar_lea.sflag [#allocation8], 1
    %626 = vsyncpa %s625, 1
    %627 = vsyncpa [#allocation15], 1
    %s628 = scalar_lea.sflag [#allocation15], 1
    %629 = vsyncpa %s628, 1
    %630 = vsyncpa [#allocation9], 1
    %s631 = scalar_lea.sflag [#allocation9], 1
    %632 = vsyncpa %s631, 1
    %633 = vsyncpa [#allocation10], 1
    %s634 = scalar_lea.sflag [#allocation10], 1
    %635 = vsyncpa %s634, 1
    %636 = vsyncpa [#allocation12], 1

</llo_original>
